<compile_context>
chip_gen: v6e
topology: v6e:2x2x1
jax: 0.10.0
libtpu: 0.0.40
codegen_flags: <defaults>
</compile_context>

<pallas_src>
import functools
import math

import jax
import jax.numpy as jnp
from jax.experimental import pallas as pl
from jax.experimental.pallas import tpu as pltpu

VMEM = pltpu.MemorySpace.VMEM


# ---------------------------------------------------------------------------
# In-kernel helpers
# ---------------------------------------------------------------------------
def _topk_keep_mask(s_col, s_row, k):
    """Keep-mask of the k largest scores (ties -> lower index wins).

    s_col: (N, 1) scores; s_row: (1, N) the SAME scores (transposed copy).
    Returns an (N, 1) f32 mask in {0, 1} with exactly k ones.
    """
    n = s_col.shape[0]
    i_idx = jax.lax.broadcasted_iota(jnp.int32, (n, n), 0)     # row index i
    j_idx = jax.lax.broadcasted_iota(jnp.int32, (n, n), 1)     # col index j
    # better[i, j] == 1  iff node j outranks node i.
    better = (s_row > s_col) | ((s_row == s_col) & (j_idx < i_idx))
    rank = jnp.sum(better.astype(jnp.float32), axis=1, keepdims=True)   # (N, 1)
    return (rank < k).astype(jnp.float32)


def _graph_conv(adj, x, w_rel, w_root, b):
    """PyG GraphConv (sum aggregation): (A @ x) @ W_rel + x @ W_root + b."""
    agg = jnp.dot(adj, x, preferred_element_type=jnp.float32)
    return (jnp.dot(agg, w_rel, preferred_element_type=jnp.float32)
            + jnp.dot(x, w_root, preferred_element_type=jnp.float32)
            + b)


def _pool_score(h, wp_row):
    """TopKPooling score, computed once: lane-dense (1, N) row on the MXU and
    its (N, 1) transpose for gating / row-broadcast comparisons."""
    s_row = jnp.tanh(jax.lax.dot_general(
        wp_row, h, (((1,), (1,)), ((), ())),
        preferred_element_type=jnp.float32))                   # (1, N) f32
    s_col = jnp.transpose(s_row)                               # (N, 1) f32
    return s_row, s_col


# ---------------------------------------------------------------------------
# The single fused kernel: conv1+relu+pool1 -> conv2+relu+pool2 -> mean -> fc
# ---------------------------------------------------------------------------
def _hgcn_fused_kernel(adj_ref, x_ref,
                       w_rel1_ref, w_root1_ref, b1_ref, wp1_ref,
                       w_rel2_ref, w_root2_ref, b2_ref, wp2_ref,
                       fc_w_ref, fc_b_ref,
                       out_ref, *, k1, k2):
    adj = adj_ref[...]                                         # (N, N) f32
    x = x_ref[...]                                             # (N, Cin) f32

    # ---- layer 1: GraphConv + ReLU, TopKPooling gate & keep-mask ----------
    h1 = jnp.maximum(
        _graph_conv(adj, x, w_rel1_ref[...], w_root1_ref[...], b1_ref[...]),
        0.0)                                                   # (N, H)
    s1_row, s1_col = _pool_score(h1, wp1_ref[...])
    keep1 = _topk_keep_mask(s1_col, s1_row, k1)                # (N, 1) {0,1}
    # Gated features; dropped rows are zeroed, so they contribute nothing to
    # conv2's aggregation (equivalent to filtering edges to the kept set).
    x2 = h1 * s1_col * keep1

    # ---- layer 2: GraphConv + ReLU, TopKPooling restricted to kept nodes --
    h2 = jnp.maximum(
        _graph_conv(adj, x2, w_rel2_ref[...], w_root2_ref[...], b2_ref[...]),
        0.0)                                                   # (N, H)
    s2_row, s2_col = _pool_score(h2, wp2_ref[...])
    # Push pool1-dropped nodes below any real tanh score (range [-1, 1]) so
    # they cannot occupy a top-k2 slot; the final mask is also ANDed with
    # keep1 for explicitness.
    s2m_col = jnp.where(keep1 > 0.0, s2_col, jnp.float32(-2.0))
    s2m_row = jnp.transpose(s2m_col)
    keep2 = _topk_keep_mask(s2m_col, s2m_row, k2) * keep1      # (N, 1) {0,1}

    # ---- global mean pool over the k2 kept nodes + final Linear -----------
    pooled = jnp.sum(h2 * s2_col * keep2, axis=0, keepdims=True) * (1.0 / k2)
    out_ref[...] = (jnp.dot(pooled, fc_w_ref[...],
                            preferred_element_type=jnp.float32)
                    + fc_b_ref[...])                           # (1, O)


# ---------------------------------------------------------------------------
# Wrapper: one pallas_call for the whole forward (single graph).
# ---------------------------------------------------------------------------
def hierarchical_gcn_forward(x, adj, params, *, ratio=0.8):
    """x: (N, Cin) f32; adj: (N, N) f32 with adj[dst, src] = multiplicity."""
    n = x.shape[0]
    k1 = int(math.ceil(ratio * n))             # PyG: k = ceil(ratio * num_nodes)
    k2 = int(math.ceil(ratio * k1))
    out_ch = params["fc_w"].shape[1]

    kernel = functools.partial(_hgcn_fused_kernel, k1=k1, k2=k2)
    return pl.pallas_call(
        kernel,
        out_shape=jax.ShapeDtypeStruct((1, out_ch), jnp.float32),
        in_specs=[pl.BlockSpec(memory_space=VMEM)] * 12,
        out_specs=pl.BlockSpec(memory_space=VMEM),
    )(adj, x,
      params["w_rel1"], params["w_root1"], params["b1"], params["wp1"],
      params["w_rel2"], params["w_root2"], params["b2"], params["wp2"],
      params["fc_w"], params["fc_b"])


# ---------------------------------------------------------------------------
# Graph-static preprocessing (hoisted out of the jitted hot path).
# ---------------------------------------------------------------------------
def build_dense_adj(edge_index, num_nodes):
    src, dst = edge_index[0], edge_index[1]
    return jnp.zeros((num_nodes, num_nodes), jnp.float32).at[dst, src].add(1.0)


# ---------------------------------------------------------------------------
# Deterministic parameter init (shapes from the module __init__) + one-time
# kernel-ready packing (pool-weight normalization).  Everything stays f32 so
# the top-k selection matches the f32 PyTorch reference bit-for-bit.
# ---------------------------------------------------------------------------
def init_params(key, in_channels, hidden_channels, out_channels):
    ks = jax.random.split(key, 10)

    def u(k, shape, fan_in):
        bound = 1.0 / math.sqrt(fan_in)
        return jax.random.uniform(k, shape, jnp.float32, -bound, bound)

    return {
        # GraphConv(in, hidden): lin_rel (bias), lin_root (no bias)
        "conv1_w_rel":  u(ks[0], (in_channels, hidden_channels), in_channels),
        "conv1_b_rel":  u(ks[1], (1, hidden_channels), in_channels),
        "conv1_w_root": u(ks[2], (in_channels, hidden_channels), in_channels),
        # TopKPooling(hidden): weight (1, hidden)
        "pool1_w":      u(ks[3], (1, hidden_channels), hidden_channels),
        # GraphConv(hidden, hidden)
        "conv2_w_rel":  u(ks[4], (hidden_channels, hidden_channels), hidden_channels),
        "conv2_b_rel":  u(ks[5], (1, hidden_channels), hidden_channels),
        "conv2_w_root": u(ks[6], (hidden_channels, hidden_channels), hidden_channels),
        "pool2_w":      u(ks[7], (1, hidden_channels), hidden_channels),
        # Linear(hidden, out)
        "fc_w":         u(ks[8], (hidden_channels, out_channels), hidden_channels),
        "fc_b":         u(ks[9], (1, out_channels), hidden_channels),
    }


def prepare_params(p):
    """One-time packing outside the hot path (pool weight pre-normalization)."""
    def unit_row(w):                                   # (1, H) -> w / ||w||_2
        return w / jnp.sqrt(jnp.sum(w * w))

    return {
        "w_rel1":  p["conv1_w_rel"],   "w_root1": p["conv1_w_root"],
        "b1":      p["conv1_b_rel"],   "wp1":     unit_row(p["pool1_w"]),
        "w_rel2":  p["conv2_w_rel"],   "w_root2": p["conv2_w_root"],
        "b2":      p["conv2_b_rel"],   "wp2":     unit_row(p["pool2_w"]),
        "fc_w":    p["fc_w"],          "fc_b":    p["fc_b"],
    }


if __name__ == "__main__":
    IN_CH, HID_CH, OUT_CH = 4, 32, 8
    N_NODES = 16

    key = jax.random.PRNGKey(0)
    k_x, k_p = jax.random.split(key)

    # node features
    x = jax.random.normal(k_x, (N_NODES, IN_CH), jnp.float32)

    # deterministic bidirectional ring graph + a few chords
    src, dst = [], []
    for i in range(N_NODES):
        j = (i + 1) % N_NODES
        src += [i, j]
        dst += [j, i]
        if i % 4 == 0:
            j2 = (i + 5) % N_NODES
            src += [i, j2]
            dst += [j2, i]
    edge_index = jnp.array([src, dst], dtype=jnp.int32)      # (2, E)

    batch = jnp.zeros((N_NODES,), dtype=jnp.int32)           # single graph
    del batch  # TODO(synk): multi-graph batching (per-graph dynamic k) unsupported

    params = prepare_params(init_params(k_p, IN_CH, HID_CH, OUT_CH))
    adj = build_dense_adj(edge_index, N_NODES)    # graph-static, outside the hot path

    fwd = jax.jit(functools.partial(hierarchical_gcn_forward, ratio=0.8))
    out = jax.block_until_ready(fwd(x, adj, params))
    assert out.shape == (1, OUT_CH) and out.dtype == jnp.float32
    print("KERNEL_OK")
</pallas_src>

<mosaic_0001>
module attributes {stable_mosaic.version = 11 : i64} {
  func.func @_hgcn_fused_kernel(%arg0: memref<16x16xf32, #tpu.memory_space<vmem>>, %arg1: memref<16x4xf32, #tpu.memory_space<vmem>>, %arg2: memref<4x32xf32, #tpu.memory_space<vmem>>, %arg3: memref<4x32xf32, #tpu.memory_space<vmem>>, %arg4: memref<1x32xf32, #tpu.memory_space<vmem>>, %arg5: memref<1x32xf32, #tpu.memory_space<vmem>>, %arg6: memref<32x32xf32, #tpu.memory_space<vmem>>, %arg7: memref<32x32xf32, #tpu.memory_space<vmem>>, %arg8: memref<1x32xf32, #tpu.memory_space<vmem>>, %arg9: memref<1x32xf32, #tpu.memory_space<vmem>>, %arg10: memref<32x8xf32, #tpu.memory_space<vmem>>, %arg11: memref<1x8xf32, #tpu.memory_space<vmem>>, %arg12: memref<1x8xf32, #tpu.memory_space<vmem>>) attributes {dimension_semantics = [], scalar_prefetch = 0 : i64, scratch_operands = 0 : i64, tpu.core_type = #tpu.core_type<tc>} {
    %c0 = arith.constant 0 : index
    %c0_0 = arith.constant 0 : index
    %0 = vector.load %arg0[%c0, %c0_0] : memref<16x16xf32, #tpu.memory_space<vmem>>, vector<16x16xf32>
    %c0_1 = arith.constant 0 : index
    %c0_2 = arith.constant 0 : index
    %1 = vector.load %arg1[%c0_1, %c0_2] : memref<16x4xf32, #tpu.memory_space<vmem>>, vector<16x4xf32>
    %c0_3 = arith.constant 0 : index
    %c0_4 = arith.constant 0 : index
    %2 = vector.load %arg2[%c0_3, %c0_4] : memref<4x32xf32, #tpu.memory_space<vmem>>, vector<4x32xf32>
    %c0_5 = arith.constant 0 : index
    %c0_6 = arith.constant 0 : index
    %3 = vector.load %arg3[%c0_5, %c0_6] : memref<4x32xf32, #tpu.memory_space<vmem>>, vector<4x32xf32>
    %c0_7 = arith.constant 0 : index
    %c0_8 = arith.constant 0 : index
    %4 = vector.load %arg4[%c0_7, %c0_8] : memref<1x32xf32, #tpu.memory_space<vmem>>, vector<1x32xf32>
    %cst = arith.constant dense<0.000000e+00> : vector<16x4xf32>
    %5 = tpu.matmul %0, %1, %cst {dimension_numbers = #tpu.dot_dimension_numbers<[1], [0], [0], [1], [0, 0, 1, 1], [], []>} : vector<16x16xf32>, vector<16x4xf32>, vector<16x4xf32> -> vector<16x4xf32>
    %cst_9 = arith.constant dense<0.000000e+00> : vector<16x32xf32>
    %6 = tpu.matmul %5, %2, %cst_9 {dimension_numbers = #tpu.dot_dimension_numbers<[1], [0], [0], [1], [0, 0, 1, 1], [], []>} : vector<16x4xf32>, vector<4x32xf32>, vector<16x32xf32> -> vector<16x32xf32>
    %cst_10 = arith.constant dense<0.000000e+00> : vector<16x32xf32>
    %7 = tpu.matmul %1, %3, %cst_10 {dimension_numbers = #tpu.dot_dimension_numbers<[1], [0], [0], [1], [0, 0, 1, 1], [], []>} : vector<16x4xf32>, vector<4x32xf32>, vector<16x32xf32> -> vector<16x32xf32>
    %8 = arith.addf %6, %7 : vector<16x32xf32>
    %9 = vector.broadcast %4 : vector<1x32xf32> to vector<16x32xf32>
    %10 = arith.addf %8, %9 : vector<16x32xf32>
    %cst_11 = arith.constant 0.000000e+00 : f32
    %11 = vector.broadcast %cst_11 : f32 to vector<16x32xf32>
    %12 = arith.maximumf %10, %11 : vector<16x32xf32>
    %c0_12 = arith.constant 0 : index
    %c0_13 = arith.constant 0 : index
    %13 = vector.load %arg5[%c0_12, %c0_13] : memref<1x32xf32, #tpu.memory_space<vmem>>, vector<1x32xf32>
    %cst_14 = arith.constant dense<0.000000e+00> : vector<1x16xf32>
    %14 = tpu.matmul %13, %12, %cst_14 {dimension_numbers = #tpu.dot_dimension_numbers<[1], [1], [0], [0], [0, 0, 1, 0], [], []>} : vector<1x32xf32>, vector<16x32xf32>, vector<1x16xf32> -> vector<1x16xf32>
    %15 = math.tanh %14 : vector<1x16xf32>
    %16 = tpu.transpose %15, [1, 0] : vector<1x16xf32> -> vector<16x1xf32>
    %17 = tpu.iota {dimensions = array<i32: 0>} : vector<16x16xi32>
    %18 = tpu.iota {dimensions = array<i32: 1>} : vector<16x16xi32>
    %19 = vector.broadcast %15 : vector<1x16xf32> to vector<16x16xf32>
    %20 = vector.broadcast %16 : vector<16x1xf32> to vector<16x16xf32>
    %21 = arith.cmpf ogt, %19, %20 : vector<16x16xf32>
    %22 = vector.broadcast %15 : vector<1x16xf32> to vector<16x16xf32>
    %23 = vector.broadcast %16 : vector<16x1xf32> to vector<16x16xf32>
    %24 = arith.cmpf oeq, %22, %23 : vector<16x16xf32>
    %25 = arith.cmpi slt, %18, %17 : vector<16x16xi32>
    %26 = arith.andi %24, %25 : vector<16x16xi1>
    %27 = arith.ori %21, %26 : vector<16x16xi1>
    %28 = arith.extui %27 : vector<16x16xi1> to vector<16x16xi32>
    %29 = arith.sitofp %28 : vector<16x16xi32> to vector<16x16xf32>
    %cst_15 = arith.constant dense<0.000000e+00> : vector<16xf32>
    %30 = vector.multi_reduction <add>, %29, %cst_15 [1] : vector<16x16xf32> to vector<16xf32>
    %31 = vector.shape_cast %30 : vector<16xf32> to vector<16x1xf32>
    %cst_16 = arith.constant 1.300000e+01 : f32
    %32 = vector.broadcast %cst_16 : f32 to vector<16x1xf32>
    %33 = arith.cmpf olt, %31, %32 : vector<16x1xf32>
    %34 = arith.extui %33 : vector<16x1xi1> to vector<16x1xi32>
    %35 = arith.sitofp %34 : vector<16x1xi32> to vector<16x1xf32>
    %36 = vector.broadcast %16 : vector<16x1xf32> to vector<16x32xf32>
    %37 = arith.mulf %12, %36 : vector<16x32xf32>
    %38 = vector.broadcast %35 : vector<16x1xf32> to vector<16x32xf32>
    %39 = arith.mulf %37, %38 : vector<16x32xf32>
    %c0_17 = arith.constant 0 : index
    %c0_18 = arith.constant 0 : index
    %40 = vector.load %arg6[%c0_17, %c0_18] : memref<32x32xf32, #tpu.memory_space<vmem>>, vector<32x32xf32>
    %c0_19 = arith.constant 0 : index
    %c0_20 = arith.constant 0 : index
    %41 = vector.load %arg7[%c0_19, %c0_20] : memref<32x32xf32, #tpu.memory_space<vmem>>, vector<32x32xf32>
    %c0_21 = arith.constant 0 : index
    %c0_22 = arith.constant 0 : index
    %42 = vector.load %arg8[%c0_21, %c0_22] : memref<1x32xf32, #tpu.memory_space<vmem>>, vector<1x32xf32>
    %cst_23 = arith.constant dense<0.000000e+00> : vector<16x32xf32>
    %43 = tpu.matmul %0, %39, %cst_23 {dimension_numbers = #tpu.dot_dimension_numbers<[1], [0], [0], [1], [0, 0, 1, 1], [], []>} : vector<16x16xf32>, vector<16x32xf32>, vector<16x32xf32> -> vector<16x32xf32>
    %cst_24 = arith.constant dense<0.000000e+00> : vector<16x32xf32>
    %44 = tpu.matmul %43, %40, %cst_24 {dimension_numbers = #tpu.dot_dimension_numbers<[1], [0], [0], [1], [0, 0, 1, 1], [], []>} : vector<16x32xf32>, vector<32x32xf32>, vector<16x32xf32> -> vector<16x32xf32>
    %cst_25 = arith.constant dense<0.000000e+00> : vector<16x32xf32>
    %45 = tpu.matmul %39, %41, %cst_25 {dimension_numbers = #tpu.dot_dimension_numbers<[1], [0], [0], [1], [0, 0, 1, 1], [], []>} : vector<16x32xf32>, vector<32x32xf32>, vector<16x32xf32> -> vector<16x32xf32>
    %46 = arith.addf %44, %45 : vector<16x32xf32>
    %47 = vector.broadcast %42 : vector<1x32xf32> to vector<16x32xf32>
    %48 = arith.addf %46, %47 : vector<16x32xf32>
    %cst_26 = arith.constant 0.000000e+00 : f32
    %49 = vector.broadcast %cst_26 : f32 to vector<16x32xf32>
    %50 = arith.maximumf %48, %49 : vector<16x32xf32>
    %c0_27 = arith.constant 0 : index
    %c0_28 = arith.constant 0 : index
    %51 = vector.load %arg9[%c0_27, %c0_28] : memref<1x32xf32, #tpu.memory_space<vmem>>, vector<1x32xf32>
    %cst_29 = arith.constant dense<0.000000e+00> : vector<1x16xf32>
    %52 = tpu.matmul %51, %50, %cst_29 {dimension_numbers = #tpu.dot_dimension_numbers<[1], [1], [0], [0], [0, 0, 1, 0], [], []>} : vector<1x32xf32>, vector<16x32xf32>, vector<1x16xf32> -> vector<1x16xf32>
    %53 = math.tanh %52 : vector<1x16xf32>
    %54 = tpu.transpose %53, [1, 0] : vector<1x16xf32> -> vector<16x1xf32>
    %cst_30 = arith.constant 0.000000e+00 : f32
    %55 = vector.broadcast %cst_30 : f32 to vector<16x1xf32>
    %56 = arith.cmpf ogt, %35, %55 : vector<16x1xf32>
    %cst_31 = arith.constant -2.000000e+00 : f32
    %57 = vector.broadcast %cst_31 : f32 to vector<16x1xf32>
    %58 = arith.select %56, %54, %57 : vector<16x1xi1>, vector<16x1xf32>
    %59 = tpu.transpose %58, [1, 0] : vector<16x1xf32> -> vector<1x16xf32>
    %60 = tpu.iota {dimensions = array<i32: 0>} : vector<16x16xi32>
    %61 = tpu.iota {dimensions = array<i32: 1>} : vector<16x16xi32>
    %62 = vector.broadcast %59 : vector<1x16xf32> to vector<16x16xf32>
    %63 = vector.broadcast %58 : vector<16x1xf32> to vector<16x16xf32>
    %64 = arith.cmpf ogt, %62, %63 : vector<16x16xf32>
    %65 = vector.broadcast %59 : vector<1x16xf32> to vector<16x16xf32>
    %66 = vector.broadcast %58 : vector<16x1xf32> to vector<16x16xf32>
    %67 = arith.cmpf oeq, %65, %66 : vector<16x16xf32>
    %68 = arith.cmpi slt, %61, %60 : vector<16x16xi32>
    %69 = arith.andi %67, %68 : vector<16x16xi1>
    %70 = arith.ori %64, %69 : vector<16x16xi1>
    %71 = arith.extui %70 : vector<16x16xi1> to vector<16x16xi32>
    %72 = arith.sitofp %71 : vector<16x16xi32> to vector<16x16xf32>
    %cst_32 = arith.constant dense<0.000000e+00> : vector<16xf32>
    %73 = vector.multi_reduction <add>, %72, %cst_32 [1] : vector<16x16xf32> to vector<16xf32>
    %74 = vector.shape_cast %73 : vector<16xf32> to vector<16x1xf32>
    %cst_33 = arith.constant 1.100000e+01 : f32
    %75 = vector.broadcast %cst_33 : f32 to vector<16x1xf32>
    %76 = arith.cmpf olt, %74, %75 : vector<16x1xf32>
    %77 = arith.extui %76 : vector<16x1xi1> to vector<16x1xi32>
    %78 = arith.sitofp %77 : vector<16x1xi32> to vector<16x1xf32>
    %79 = arith.mulf %78, %35 : vector<16x1xf32>
    %80 = vector.broadcast %54 : vector<16x1xf32> to vector<16x32xf32>
    %81 = arith.mulf %50, %80 : vector<16x32xf32>
    %82 = vector.broadcast %79 : vector<16x1xf32> to vector<16x32xf32>
    %83 = arith.mulf %81, %82 : vector<16x32xf32>
    %cst_34 = arith.constant dense<0.000000e+00> : vector<32xf32>
    %84 = vector.multi_reduction <add>, %83, %cst_34 [0] : vector<16x32xf32> to vector<32xf32>
    %85 = vector.shape_cast %84 : vector<32xf32> to vector<1x32xf32>
    %cst_35 = arith.constant 0.0909090936 : f32
    %86 = vector.broadcast %cst_35 : f32 to vector<1x32xf32>
    %87 = arith.mulf %85, %86 : vector<1x32xf32>
    %c0_36 = arith.constant 0 : index
    %c0_37 = arith.constant 0 : index
    %88 = vector.load %arg10[%c0_36, %c0_37] : memref<32x8xf32, #tpu.memory_space<vmem>>, vector<32x8xf32>
    %cst_38 = arith.constant dense<0.000000e+00> : vector<1x8xf32>
    %89 = tpu.matmul %87, %88, %cst_38 {dimension_numbers = #tpu.dot_dimension_numbers<[1], [0], [0], [1], [0, 0, 1, 1], [], []>} : vector<1x32xf32>, vector<32x8xf32>, vector<1x8xf32> -> vector<1x8xf32>
    %c0_39 = arith.constant 0 : index
    %c0_40 = arith.constant 0 : index
    %90 = vector.load %arg11[%c0_39, %c0_40] : memref<1x8xf32, #tpu.memory_space<vmem>>, vector<1x8xf32>
    %91 = arith.addf %89, %90 : vector<1x8xf32>
    %c0_41 = arith.constant 0 : index
    %c0_42 = arith.constant 0 : index
    %92 = vector.load %arg12[%c0_41, %c0_42] : memref<1x8xf32, #tpu.memory_space<vmem>>, vector<1x8xf32>
    tpu.vector_store %arg12[%c0_41, %c0_42], %91 {strides = array<i32>} : memref<1x8xf32, #tpu.memory_space<vmem>>, vector<1x8xf32>,
    return
  }
}

</mosaic_0001>

<llo_original>
// kernel: hierarchical_gcn_forward.1
$region0: #{hierarchical_gcn_forward.1}
  #allocation0 [shape = 'u32[]', space=smem, size = 0x4, offset = 0x4, fixed_abs, tag = 'smem constant byte address 0x4 - core index']
  #allocation1 [shape = 'u32[144,128]{1,0:T(1,128)}', space=vmem, size = 0x12000, scoped, tag = 'internal scratch']
  %s0 = inlined_call_operand.hbm [shape: f32[16,16], index: 0, kind: input, shape index: {}]
  %s1 = inlined_call_operand.vmem [shape: f32[16,4], index: 1, kind: input, shape index: {}]
  %s2 = inlined_call_operand.vmem [shape: f32[4,32], index: 2, kind: input, shape index: {}]
  %s3 = inlined_call_operand.vmem [shape: f32[4,32], index: 3, kind: input, shape index: {}]
  %s4 = inlined_call_operand.hbm [shape: f32[1,32], index: 4, kind: input, shape index: {}]
  %s5 = inlined_call_operand.vmem [shape: f32[1,32], index: 5, kind: input, shape index: {}]
  %s6 = inlined_call_operand.vmem [shape: f32[32,32], index: 6, kind: input, shape index: {}]
  %s7 = inlined_call_operand.vmem [shape: f32[32,32], index: 7, kind: input, shape index: {}]
  %s8 = inlined_call_operand.hbm [shape: f32[1,32], index: 8, kind: input, shape index: {}]
  %s9 = inlined_call_operand.vmem [shape: f32[1,32], index: 9, kind: input, shape index: {}]
  %s10 = inlined_call_operand.vmem [shape: f32[32,8], index: 10, kind: input, shape index: {}]
  %s11 = inlined_call_operand.hbm [shape: f32[1,8], index: 11, kind: input, shape index: {}]
  %s12 = inlined_call_operand.hbm [shape: f32[1,8], index: 12, kind: output, shape index: {}]
  %s13 = sld [smem:[#allocation0]]
  $region74: #{hierarchical_gcn_forward.1} parent=0
    _
  %s15 = ssub.s32 1, %s13
  %s16 = scalar_select 0, %s15, %s13
  $region1: #{hierarchical_gcn_forward.1} parent=0
    #allocation2 [shape = 'u8[8192]{0}', space=vmem, size = 0x2000, scoped, tag = 'input window, operand 0, single buffered']
    #allocation3 [shape = 's32[1]{0}', space=sflag, size = 0x4, scoped, tag = 'scoped memory for hierarchical_gcn_forward.1']
    #allocation4 [shape = 's32[1]{0}', space=sflag, size = 0x4, scoped, tag = 'scoped memory for hierarchical_gcn_forward.1']
    #allocation5 [shape = 'u8[512]{0}', space=vmem, size = 0x400, scoped, tag = 'input window, operand 4, single buffered']
    #allocation6 [shape = 's32[1]{0}', space=sflag, size = 0x4, scoped, tag = 'scoped memory for hierarchical_gcn_forward.1']
    #allocation7 [shape = 'u8[512]{0}', space=vmem, size = 0x400, scoped, tag = 'input window, operand 8, single buffered']
    #allocation8 [shape = 'u8[512]{0}', space=vmem, size = 0x400, scoped, tag = 'input window, operand 11, single buffered']
    #allocation9 [shape = 's32[1]{0}', space=sflag, size = 0x4, scoped, tag = 'scoped memory for hierarchical_gcn_forward.1']
    #allocation10 [shape = 'u8[512]{0}', space=vmem, size = 0x400, scoped, tag = 'output window, operand 0, single buffered']
    %17 = vsyncpa [#allocation3], 0
    %18 = vsyncpa [#allocation6], 0
    %19 = vsyncpa [#allocation9], 0
    %20 = vsyncpa [#allocation4], 0
    // Predicated region
    $region2: #{hierarchical_gcn_forward.1} parent=1 // pred_check
      _
    $region3: #{hierarchical_gcn_forward.1} parent=1 // pred_check_branch
      %22 = sbr.rel (0) target = $region5
    $region4: #{hierarchical_gcn_forward.1} parent=1 // pred_region
      %s24 = ssub.s32 256, 256
      %25 = vsyncadd [#allocation3], %s24
      %s26 = sshll.u32 [#allocation2], 4
      %s27 = int_to_ptr.vmem [resolvable:$true] %s26
      %32 = dma.hbm_to_vmem [thread:$0]  %s0, 256, %s27, [#allocation3], 128, 128, 8
    $region5: #{hierarchical_gcn_forward.1} parent=1 // pred_fallthru
      _
    // Predicated region
    $region6: #{hierarchical_gcn_forward.1} parent=1 // pred_check
      _
    $region7: #{hierarchical_gcn_forward.1} parent=1 // pred_check_branch
      %34 = sbr.rel (0) target = $region9
    $region8: #{hierarchical_gcn_forward.1} parent=1 // pred_region
      _
    $region9: #{hierarchical_gcn_forward.1} parent=1 // pred_fallthru
      _
    // Predicated region
    $region10: #{hierarchical_gcn_forward.1} parent=1 // pred_check
      _
    $region11: #{hierarchical_gcn_forward.1} parent=1 // pred_check_branch
      %36 = sbr.rel (0) target = $region13
    $region12: #{hierarchical_gcn_forward.1} parent=1 // pred_region
      _
    $region13: #{hierarchical_gcn_forward.1} parent=1 // pred_fallthru
      _
    // Predicated region
    $region14: #{hierarchical_gcn_forward.1} parent=1 // pred_check
      _
    $region15: #{hierarchical_gcn_forward.1} parent=1 // pred_check_branch
      %38 = sbr.rel (0) target = $region17
    $region16: #{hierarchical_gcn_forward.1} parent=1 // pred_region
      _
    $region17: #{hierarchical_gcn_forward.1} parent=1 // pred_fallthru
      _
    // Predicated region
    $region18: #{hierarchical_gcn_forward.1} parent=1 // pred_check
      _
    $region19: #{hierarchical_gcn_forward.1} parent=1 // pred_check_branch
      %40 = sbr.rel (0) target = $region21
    $region20: #{hierarchical_gcn_forward.1} parent=1 // pred_region
      %s42 = ssub.s32 16, 16
      %43 = vsyncadd [#allocation6], %s42
      %s45 = sshll.u32 [#allocation5], 4
      %s46 = int_to_ptr.vmem [resolvable:$true] %s45
      %48 = dma.hbm_to_vmem [thread:$0]  %s4, 16, %s46, [#allocation6]
    $region21: #{hierarchical_gcn_forward.1} parent=1 // pred_fallthru
      _
    // Predicated region
    $region22: #{hierarchical_gcn_forward.1} parent=1 // pred_check
      _
    $region23: #{hierarchical_gcn_forward.1} parent=1 // pred_check_branch
      %50 = sbr.rel (0) target = $region25
    $region24: #{hierarchical_gcn_forward.1} parent=1 // pred_region
      _
    $region25: #{hierarchical_gcn_forward.1} parent=1 // pred_fallthru
      _
    // Predicated region
    $region26: #{hierarchical_gcn_forward.1} parent=1 // pred_check
      _
    $region27: #{hierarchical_gcn_forward.1} parent=1 // pred_check_branch
      %52 = sbr.rel (0) target = $region29
    $region28: #{hierarchical_gcn_forward.1} parent=1 // pred_region
      _
    $region29: #{hierarchical_gcn_forward.1} parent=1 // pred_fallthru
      _
    // Predicated region
    $region30: #{hierarchical_gcn_forward.1} parent=1 // pred_check
      _
    $region31: #{hierarchical_gcn_forward.1} parent=1 // pred_check_branch
      %54 = sbr.rel (0) target = $region33
    $region32: #{hierarchical_gcn_forward.1} parent=1 // pred_region
      _
    $region33: #{hierarchical_gcn_forward.1} parent=1 // pred_fallthru
      _
    // Predicated region
    $region34: #{hierarchical_gcn_forward.1} parent=1 // pred_check
      _
    $region35: #{hierarchical_gcn_forward.1} parent=1 // pred_check_branch
      %56 = sbr.rel (0) target = $region37
    $region36: #{hierarchical_gcn_forward.1} parent=1 // pred_region
      %s58 = ssub.s32 16, 16
      %59 = vsyncadd [#allocation6], %s58
      %s61 = sshll.u32 [#allocation7], 4
      %s62 = int_to_ptr.vmem [resolvable:$true] %s61
      %64 = dma.hbm_to_vmem [thread:$0]  %s8, 16, %s62, [#allocation6]
    $region37: #{hierarchical_gcn_forward.1} parent=1 // pred_fallthru
      _
    // Predicated region
    $region38: #{hierarchical_gcn_forward.1} parent=1 // pred_check
      _
    $region39: #{hierarchical_gcn_forward.1} parent=1 // pred_check_branch
      %66 = sbr.rel (0) target = $region41
    $region40: #{hierarchical_gcn_forward.1} parent=1 // pred_region
      _
    $region41: #{hierarchical_gcn_forward.1} parent=1 // pred_fallthru
      _
    // Predicated region
    $region42: #{hierarchical_gcn_forward.1} parent=1 // pred_check
      _
    $region43: #{hierarchical_gcn_forward.1} parent=1 // pred_check_branch
      %68 = sbr.rel (0) target = $region45
    $region44: #{hierarchical_gcn_forward.1} parent=1 // pred_region
      _
    $region45: #{hierarchical_gcn_forward.1} parent=1 // pred_fallthru
      _
    // Predicated region
    $region46: #{hierarchical_gcn_forward.1} parent=1 // pred_check
      _
    $region47: #{hierarchical_gcn_forward.1} parent=1 // pred_check_branch
      %70 = sbr.rel (0) target = $region49
    $region48: #{hierarchical_gcn_forward.1} parent=1 // pred_region
      %s72 = ssub.s32 16, 16
      %73 = vsyncadd [#allocation9], %s72
      %s75 = sshll.u32 [#allocation8], 4
      %s76 = int_to_ptr.vmem [resolvable:$true] %s75
      %78 = dma.hbm_to_vmem [thread:$0]  %s11, 16, %s76, [#allocation9]
    $region49: #{hierarchical_gcn_forward.1} parent=1 // pred_fallthru
      _
    // Predicated region
    $region50: #{hierarchical_gcn_forward.1} parent=1 // pred_check
      _
    $region51: #{hierarchical_gcn_forward.1} parent=1 // pred_check_branch
      %80 = sbr.rel (0) target = $region53
    $region52: #{hierarchical_gcn_forward.1} parent=1 // pred_region
      %81 = dma.done [#allocation3], 256
    $region53: #{hierarchical_gcn_forward.1} parent=1 // pred_fallthru
      _
    // Predicated region
    $region54: #{hierarchical_gcn_forward.1} parent=1 // pred_check
      _
    $region55: #{hierarchical_gcn_forward.1} parent=1 // pred_check_branch
      %83 = sbr.rel (0) target = $region57
    $region56: #{hierarchical_gcn_forward.1} parent=1 // pred_region
      %84 = dma.done [#allocation6], 16
    $region57: #{hierarchical_gcn_forward.1} parent=1 // pred_fallthru
      _
    // Predicated region
    $region58: #{hierarchical_gcn_forward.1} parent=1 // pred_check
      _
    $region59: #{hierarchical_gcn_forward.1} parent=1 // pred_check_branch
      %86 = sbr.rel (0) target = $region61
    $region60: #{hierarchical_gcn_forward.1} parent=1 // pred_region
      %87 = dma.done [#allocation6], 16
    $region61: #{hierarchical_gcn_forward.1} parent=1 // pred_fallthru
      _
    // Predicated region
    $region62: #{hierarchical_gcn_forward.1} parent=1 // pred_check
      _
    $region63: #{hierarchical_gcn_forward.1} parent=1 // pred_check_branch
      %89 = sbr.rel (0) target = $region65
    $region64: #{hierarchical_gcn_forward.1} parent=1 // pred_region
      %90 = dma.done [#allocation9], 16
    $region65: #{hierarchical_gcn_forward.1} parent=1 // pred_fallthru
      _
    %v91 = vld [vmem:[#allocation2] sm:$0xff]
    %v92 = vld [vmem:[#allocation2 + $0x8] sm:$0xff]
    %v93 = vld [vmem:[%s1] sm:$0xff]
    %v94 = vld [vmem:[%s1 + $0x8] sm:$0xff]
    %v95 = vld [vmem:[%s2] sm:$0xf]
    %v96 = vld [vmem:[%s3] sm:$0xf]
    %v97 = vld [vmem:[#allocation5] sm:$0x1]
    %vm98 = vcmask 130048
    %v100 = vsel %vm98, %v91, 0
    %v103 = vsel %vm98, %v92, 0
    %105 = vmatprep.subr.mxu0 0.0
    %106 = vmatpush1.msra.mxu0 0.0
    %107 = vmatprep.subr.mxu0 0.0
    %108 = vmatpush1.msra.mxu0 0.0
    %109 = vmatprep.subr.mxu0 0.0
    %110 = vmatpush1.msra.mxu0 0.0
    %111 = vmatprep.subr.mxu0 0.0
    %112 = vmatpush1.msra.mxu0 0.0
    %113 = vmatprep.subr.mxu0 0.0
    %114 = vmatpush1.msra.mxu0 0.0
    %115 = vmatprep.subr.mxu0 0.0
    %116 = vmatpush1.msra.mxu0 0.0
    %117 = vmatprep.subr.mxu0 0.0
    %118 = vmatpush1.msra.mxu0 0.0
    %119 = vmatprep.subr.mxu0 0.0
    %120 = vmatpush1.msra.mxu0 0.0
    %121 = vmatprep.subr.mxu0 0.0
    %122 = vmatpush1.msra.mxu0 0.0
    %123 = vmatprep.subr.mxu0 0.0
    %124 = vmatpush1.msra.mxu0 0.0
    %125 = vmatprep.subr.mxu0 0.0
    %126 = vmatpush1.msra.mxu0 0.0
    %127 = vmatprep.subr.mxu0 0.0
    %128 = vmatpush1.msra.mxu0 0.0
    %129 = vmatprep.subr.mxu0 0.0
    %130 = vmatpush1.msra.mxu0 0.0
    %131 = vmatprep.subr.mxu0 0.0
    %132 = vmatpush1.msra.mxu0 0.0
    %133 = vmatprep.subr.mxu0 0.0
    %134 = vmatpush1.msra.mxu0 %v94
    %135 = vmatprep.subr.mxu0 0.0
    %136 = vmatpush1.msra.mxu0 %v93
    %137 = vmatprep.subr.mxu0 0.0
    %138 = vmatpush2.msra.mxu0 0.0
    %139 = vmatprep.subr.mxu0 0.0
    %140 = vmatpush2.msra.mxu0 0.0
    %141 = vmatprep.subr.mxu0 0.0
    %142 = vmatpush2.msra.mxu0 0.0
    %143 = vmatprep.subr.mxu0 0.0
    %144 = vmatpush2.msra.mxu0 0.0
    %145 = vmatprep.subr.mxu0 0.0
    %146 = vmatpush2.msra.mxu0 0.0
    %147 = vmatprep.subr.mxu0 0.0
    %148 = vmatpush2.msra.mxu0 0.0
    %149 = vmatprep.subr.mxu0 0.0
    %150 = vmatpush2.msra.mxu0 0.0
    %151 = vmatprep.subr.mxu0 0.0
    %152 = vmatpush2.msra.mxu0 0.0
    %153 = vmatprep.subr.mxu0 0.0
    %154 = vmatpush2.msra.mxu0 0.0
    %155 = vmatprep.subr.mxu0 0.0
    %156 = vmatpush2.msra.mxu0 0.0
    %157 = vmatprep.subr.mxu0 0.0
    %158 = vmatpush2.msra.mxu0 0.0
    %159 = vmatprep.subr.mxu0 0.0
    %160 = vmatpush2.msra.mxu0 0.0
    %161 = vmatprep.subr.mxu0 0.0
    %162 = vmatpush2.msra.mxu0 0.0
    %163 = vmatprep.subr.mxu0 0.0
    %164 = vmatpush2.msra.mxu0 0.0
    %165 = vmatprep.subr.mxu0 0.0
    %166 = vmatpush2.msra.mxu0 0.0
    %167 = vmatprep.subr.mxu0 0.0
    %168 = vmatpush2.msra.mxu0 0.0
    %169 = vmatprep.mubr.f32.mxu0 0.0
    %170 = vmatmul.mubr.f32.gmra.mxu0 %v100
    %v171 = vpop.f32.mrf.mxu0
    %v172 = vadd.f32 0.0, %v171
    %v173 = vpop.f32.mrf.mxu0
    %174 = vmatprep.mubr.f32.mxu0 0.0
    %175 = vmatmul.mubr.f32.gmra.mxu0 %v103
    %v176 = vpop.f32.mrf.mxu0
    %v177 = vadd.f32 0.0, %v176
    %v178 = vpop.f32.mrf.mxu0
    %179 = vdwg.mxu0
    %vm180 = vcmask 31744
    %v182 = vsel %vm180, %v93, 0
    %v185 = vsel %vm180, %v94, 0
    %vm187 = vcmask 1043456
    %v189 = vsel %vm187, %v96, 0
    %191 = vmatprep.subr.mxu0 0.0
    %192 = vmatpush1.msra.mxu0 0.0
    %193 = vmatprep.subr.mxu0 0.0
    %194 = vmatpush1.msra.mxu0 0.0
    %195 = vmatprep.subr.mxu0 0.0
    %196 = vmatpush1.msra.mxu0 0.0
    %197 = vmatprep.subr.mxu0 0.0
    %198 = vmatpush1.msra.mxu0 0.0
    %199 = vmatprep.subr.mxu0 0.0
    %200 = vmatpush1.msra.mxu0 0.0
    %201 = vmatprep.subr.mxu0 0.0
    %202 = vmatpush1.msra.mxu0 0.0
    %203 = vmatprep.subr.mxu0 0.0
    %204 = vmatpush1.msra.mxu0 0.0
    %205 = vmatprep.subr.mxu0 0.0
    %206 = vmatpush1.msra.mxu0 0.0
    %207 = vmatprep.subr.mxu0 0.0
    %208 = vmatpush1.msra.mxu0 0.0
    %209 = vmatprep.subr.mxu0 0.0
    %210 = vmatpush1.msra.mxu0 0.0
    %211 = vmatprep.subr.mxu0 0.0
    %212 = vmatpush1.msra.mxu0 0.0
    %213 = vmatprep.subr.mxu0 0.0
    %214 = vmatpush1.msra.mxu0 0.0
    %215 = vmatprep.subr.mxu0 0.0
    %216 = vmatpush1.msra.mxu0 0.0
    %217 = vmatprep.subr.mxu0 0.0
    %218 = vmatpush1.msra.mxu0 0.0
    %219 = vmatprep.subr.mxu0 0.0
    %220 = vmatpush1.msra.mxu0 0.0
    %221 = vmatprep.subr.mxu0 0.0
    %222 = vmatpush1.msra.mxu0 %v189
    %223 = vmatprep.subr.mxu0 0.0
    %224 = vmatpush2.msra.mxu0 0.0
    %225 = vmatprep.subr.mxu0 0.0
    %226 = vmatpush2.msra.mxu0 0.0
    %227 = vmatprep.subr.mxu0 0.0
    %228 = vmatpush2.msra.mxu0 0.0
    %229 = vmatprep.subr.mxu0 0.0
    %230 = vmatpush2.msra.mxu0 0.0
    %231 = vmatprep.subr.mxu0 0.0
    %232 = vmatpush2.msra.mxu0 0.0
    %233 = vmatprep.subr.mxu0 0.0
    %234 = vmatpush2.msra.mxu0 0.0
    %235 = vmatprep.subr.mxu0 0.0
    %236 = vmatpush2.msra.mxu0 0.0
    %237 = vmatprep.subr.mxu0 0.0
    %238 = vmatpush2.msra.mxu0 0.0
    %239 = vmatprep.subr.mxu0 0.0
    %240 = vmatpush2.msra.mxu0 0.0
    %241 = vmatprep.subr.mxu0 0.0
    %242 = vmatpush2.msra.mxu0 0.0
    %243 = vmatprep.subr.mxu0 0.0
    %244 = vmatpush2.msra.mxu0 0.0
    %245 = vmatprep.subr.mxu0 0.0
    %246 = vmatpush2.msra.mxu0 0.0
    %247 = vmatprep.subr.mxu0 0.0
    %248 = vmatpush2.msra.mxu0 0.0
    %249 = vmatprep.subr.mxu0 0.0
    %250 = vmatpush2.msra.mxu0 0.0
    %251 = vmatprep.subr.mxu0 0.0
    %252 = vmatpush2.msra.mxu0 0.0
    %253 = vmatprep.subr.mxu0 0.0
    %254 = vmatpush2.msra.mxu0 0.0
    %255 = vmatprep.mubr.f32.mxu0 0.0
    %256 = vmatmul.mubr.f32.gmra.mxu0 %v182
    %v257 = vpop.f32.mrf.mxu0
    %v258 = vadd.f32 0.0, %v257
    %v259 = vpop.f32.mrf.mxu0
    %260 = vmatprep.mubr.f32.mxu0 0.0
    %261 = vmatmul.mubr.f32.gmra.mxu0 %v185
    %v262 = vpop.f32.mrf.mxu0
    %v263 = vadd.f32 0.0, %v262
    %v264 = vpop.f32.mrf.mxu0
    %265 = vdwg.mxu0
    %v267 = vsel %vm180, %v172, 0
    %v270 = vsel %vm180, %v177, 0
    %v273 = vsel %vm187, %v95, 0
    %275 = vmatprep.subr.mxu0 0.0
    %276 = vmatpush1.msra.mxu0 0.0
    %277 = vmatprep.subr.mxu0 0.0
    %278 = vmatpush1.msra.mxu0 0.0
    %279 = vmatprep.subr.mxu0 0.0
    %280 = vmatpush1.msra.mxu0 0.0
    %281 = vmatprep.subr.mxu0 0.0
    %282 = vmatpush1.msra.mxu0 0.0
    %283 = vmatprep.subr.mxu0 0.0
    %284 = vmatpush1.msra.mxu0 0.0
    %285 = vmatprep.subr.mxu0 0.0
    %286 = vmatpush1.msra.mxu0 0.0
    %287 = vmatprep.subr.mxu0 0.0
    %288 = vmatpush1.msra.mxu0 0.0
    %289 = vmatprep.subr.mxu0 0.0
    %290 = vmatpush1.msra.mxu0 0.0
    %291 = vmatprep.subr.mxu0 0.0
    %292 = vmatpush1.msra.mxu0 0.0
    %293 = vmatprep.subr.mxu0 0.0
    %294 = vmatpush1.msra.mxu0 0.0
    %295 = vmatprep.subr.mxu0 0.0
    %296 = vmatpush1.msra.mxu0 0.0
    %297 = vmatprep.subr.mxu0 0.0
    %298 = vmatpush1.msra.mxu0 0.0
    %299 = vmatprep.subr.mxu0 0.0
    %300 = vmatpush1.msra.mxu0 0.0
    %301 = vmatprep.subr.mxu0 0.0
    %302 = vmatpush1.msra.mxu0 0.0
    %303 = vmatprep.subr.mxu0 0.0
    %304 = vmatpush1.msra.mxu0 0.0
    %305 = vmatprep.subr.mxu0 0.0
    %306 = vmatpush1.msra.mxu0 %v273
    %307 = vmatprep.subr.mxu0 0.0
    %308 = vmatpush2.msra.mxu0 0.0
    %309 = vmatprep.subr.mxu0 0.0
    %310 = vmatpush2.msra.mxu0 0.0
    %311 = vmatprep.subr.mxu0 0.0
    %312 = vmatpush2.msra.mxu0 0.0
    %313 = vmatprep.subr.mxu0 0.0
    %314 = vmatpush2.msra.mxu0 0.0
    %315 = vmatprep.subr.mxu0 0.0
    %316 = vmatpush2.msra.mxu0 0.0
    %317 = vmatprep.subr.mxu0 0.0
    %318 = vmatpush2.msra.mxu0 0.0
    %319 = vmatprep.subr.mxu0 0.0
    %320 = vmatpush2.msra.mxu0 0.0
    %321 = vmatprep.subr.mxu0 0.0
    %322 = vmatpush2.msra.mxu0 0.0
    %323 = vmatprep.subr.mxu0 0.0
    %324 = vmatpush2.msra.mxu0 0.0
    %325 = vmatprep.subr.mxu0 0.0
    %326 = vmatpush2.msra.mxu0 0.0
    %327 = vmatprep.subr.mxu0 0.0
    %328 = vmatpush2.msra.mxu0 0.0
    %329 = vmatprep.subr.mxu0 0.0
    %330 = vmatpush2.msra.mxu0 0.0
    %331 = vmatprep.subr.mxu0 0.0
    %332 = vmatpush2.msra.mxu0 0.0
    %333 = vmatprep.subr.mxu0 0.0
    %334 = vmatpush2.msra.mxu0 0.0
    %335 = vmatprep.subr.mxu0 0.0
    %336 = vmatpush2.msra.mxu0 0.0
    %337 = vmatprep.subr.mxu0 0.0
    %338 = vmatpush2.msra.mxu0 0.0
    %339 = vmatprep.mubr.f32.mxu0 0.0
    %340 = vmatmul.mubr.f32.gmra.mxu0 %v267
    %v341 = vpop.f32.mrf.mxu0
    %v342 = vadd.f32 %v258, %v341
    %v343 = vpop.f32.mrf.mxu0
    %344 = vmatprep.mubr.f32.mxu0 0.0
    %345 = vmatmul.mubr.f32.gmra.mxu0 %v270
    %v346 = vpop.f32.mrf.mxu0
    %v347 = vadd.f32 %v263, %v346
    %v348 = vpop.f32.mrf.mxu0
    %349 = vdwg.mxu0
    %v351 = vlaneseq
    %v352 = vshrl.u32 %v351, 7
    %v353 = vsub.s32 0, %v352
    %v354 = vrot.slane %v97, %v353
    %v356 = vadd.f32 %v342, %v354
    %v357 = vadd.f32 %v347, %v354
    %v358 = vmax.f32 %v356, 0.0
    %v359 = vmax.f32 %v357, 0.0
    %v360 = vld [vmem:[%s5] sm:$0x1]
    %vm361 = vcmask 261120
    %v363 = vsel %vm361, %v360, 0
    %v366 = vsel %vm361, %v358, 0
    %v369 = vsel %vm361, %v359, 0
    %371 = vmatprep.subr.mxu0 0.0
    %372 = vmatpush1.xpose.msra.mxu0 0.0
    %373 = vmatprep.subr.mxu0 0.0
    %374 = vmatpush1.xpose.msra.mxu0 0.0
    %375 = vmatprep.subr.mxu0 0.0
    %376 = vmatpush1.xpose.msra.mxu0 0.0
    %377 = vmatprep.subr.mxu0 0.0
    %378 = vmatpush1.xpose.msra.mxu0 0.0
    %379 = vmatprep.subr.mxu0 0.0
    %380 = vmatpush1.xpose.msra.mxu0 0.0
    %381 = vmatprep.subr.mxu0 0.0
    %382 = vmatpush1.xpose.msra.mxu0 0.0
    %383 = vmatprep.subr.mxu0 0.0
    %384 = vmatpush1.xpose.msra.mxu0 0.0
    %385 = vmatprep.subr.mxu0 0.0
    %386 = vmatpush1.xpose.msra.mxu0 0.0
    %387 = vmatprep.subr.mxu0 0.0
    %388 = vmatpush1.xpose.msra.mxu0 0.0
    %389 = vmatprep.subr.mxu0 0.0
    %390 = vmatpush1.xpose.msra.mxu0 0.0
    %391 = vmatprep.subr.mxu0 0.0
    %392 = vmatpush1.xpose.msra.mxu0 0.0
    %393 = vmatprep.subr.mxu0 0.0
    %394 = vmatpush1.xpose.msra.mxu0 0.0
    %395 = vmatprep.subr.mxu0 0.0
    %396 = vmatpush1.xpose.msra.mxu0 0.0
    %397 = vmatprep.subr.mxu0 0.0
    %398 = vmatpush1.xpose.msra.mxu0 0.0
    %399 = vmatprep.subr.mxu0 0.0
    %400 = vmatpush1.xpose.msra.mxu0 %v369
    %401 = vmatprep.subr.mxu0 0.0
    %402 = vmatpush1.xpose.msra.mxu0 %v366
    %403 = vmatprep.subr.mxu0 0.0
    %404 = vmatpush2.xpose.msra.mxu0 0.0
    %405 = vmatprep.subr.mxu0 0.0
    %406 = vmatpush2.xpose.msra.mxu0 0.0
    %407 = vmatprep.subr.mxu0 0.0
    %408 = vmatpush2.xpose.msra.mxu0 0.0
    %409 = vmatprep.subr.mxu0 0.0
    %410 = vmatpush2.xpose.msra.mxu0 0.0
    %411 = vmatprep.subr.mxu0 0.0
    %412 = vmatpush2.xpose.msra.mxu0 0.0
    %413 = vmatprep.subr.mxu0 0.0
    %414 = vmatpush2.xpose.msra.mxu0 0.0
    %415 = vmatprep.subr.mxu0 0.0
    %416 = vmatpush2.xpose.msra.mxu0 0.0
    %417 = vmatprep.subr.mxu0 0.0
    %418 = vmatpush2.xpose.msra.mxu0 0.0
    %419 = vmatprep.subr.mxu0 0.0
    %420 = vmatpush2.xpose.msra.mxu0 0.0
    %421 = vmatprep.subr.mxu0 0.0
    %422 = vmatpush2.xpose.msra.mxu0 0.0
    %423 = vmatprep.subr.mxu0 0.0
    %424 = vmatpush2.xpose.msra.mxu0 0.0
    %425 = vmatprep.subr.mxu0 0.0
    %426 = vmatpush2.xpose.msra.mxu0 0.0
    %427 = vmatprep.subr.mxu0 0.0
    %428 = vmatpush2.xpose.msra.mxu0 0.0
    %429 = vmatprep.subr.mxu0 0.0
    %430 = vmatpush2.xpose.msra.mxu0 0.0
    %431 = vmatprep.subr.mxu0 0.0
    %432 = vmatpush2.xpose.msra.mxu0 0.0
    %433 = vmatprep.subr.mxu0 0.0
    %434 = vmatpush2.xpose.msra.mxu0 0.0
    %435 = vmatprep.mubr.f32.mxu0 0.0
    %436 = vmatmul.mubr.f32.gmra.mxu0 %v363
    %v437 = vpop.f32.mrf.mxu0
    %v438 = vadd.f32 0.0, %v437
    %v439 = vpop.f32.mrf.mxu0
    %440 = vdwg.mxu0
    %v441 = vtanh.pop %v438
    %442 = vxpose.xlu0.b32.start [1/16] %v441, 128
    %443 = vxpose.xlu0.b32.cont [2/16] 0.0, 128
    %444 = vxpose.xlu0.b32.cont [3/16] 0.0, 128
    %445 = vxpose.xlu0.b32.cont [4/16] 0.0, 128
    %446 = vxpose.xlu0.b32.cont [5/16] 0.0, 128
    %447 = vxpose.xlu0.b32.cont [6/16] 0.0, 128
    %448 = vxpose.xlu0.b32.cont [7/16] 0.0, 128
    %449 = vxpose.xlu0.b32.cont [8/16] 0.0, 128
    %450 = vxpose.xlu0.b32.cont [9/16] 0.0, 128
    %451 = vxpose.xlu0.b32.cont [10/16] 0.0, 128
    %452 = vxpose.xlu0.b32.cont [11/16] 0.0, 128
    %453 = vxpose.xlu0.b32.cont [12/16] 0.0, 128
    %454 = vxpose.xlu0.b32.cont [13/16] 0.0, 128
    %455 = vxpose.xlu0.b32.cont [14/16] 0.0, 128
    %456 = vxpose.xlu0.b32.cont [15/16] 0.0, 128
    %457 = vxpose.xlu0.b32.end [16/16] 0.0, 128
    %v458 = vpop.trf.xlu0
    %v459 = vpop.trf.xlu0
    %v460 = vpop.trf.xlu0
    %v461 = vpop.trf.xlu0
    %v462 = vpop.trf.xlu0
    %v463 = vpop.trf.xlu0
    %v464 = vpop.trf.xlu0
    %v465 = vpop.trf.xlu0
    %v466 = vpop.trf.xlu0
    %v467 = vpop.trf.xlu0
    %v468 = vpop.trf.xlu0
    %v469 = vpop.trf.xlu0
    %v470 = vpop.trf.xlu0
    %v471 = vpop.trf.xlu0
    %v472 = vpop.trf.xlu0
    %v473 = vpop.trf.xlu0
    %v474 = vlaneseq
    %v475 = vshrl.u32 %v474, 7
    %v476 = vadd.s32 %v475, 8
    %v477 = vlaneseq
    %v478 = vand.u32 %v477, 127
    %v479 = vlaneseq
    %v480 = vshrl.u32 %v479, 7
    %v481 = vsub.s32 0, %v480
    %v482 = vrot.slane %v441, %v481
    %484 = vset.pattern.permute.xlu0 0
    %485 = vperm.xlu0 %484, %v458
    %v486 = vpop.permute.xlu0 %485
    %489 = vset.pattern.permute.xlu0 0
    %490 = vperm.xlu0 %489, %v459
    %v491 = vpop.permute.xlu0 %490
    %vm493 = vcmp.gt.f32.partialorder %v482, %v486
    %vm494 = vcmp.gt.f32.partialorder %v482, %v491
    %vm495 = vcmp.eq.f32.partialorder %v482, %v486
    %vm496 = vcmp.eq.f32.partialorder %v482, %v491
    %vm497 = vcmp.lt.s32.totalorder %v478, %v475
    %vm498 = vcmp.lt.s32.totalorder %v478, %v476
    %vm499 = vmand %vm495, %vm497
    %vm500 = vmand %vm496, %vm498
    %vm501 = vmor %vm493, %vm499
    %vm502 = vmor %vm494, %vm500
    %v503 = vsel %vm501, 1, 0
    %v504 = vsel %vm502, 1, 0
    %v505 = vcvt.s32.f32 %v503
    %v506 = vcvt.s32.f32 %v504
    %v507 = vsel %vm98, %v505, 0.0
    %508 = vadd.xlane.f32.xlu0 %v507
    %v509 = vpop.xlane.xlu0 %508
    %v510 = vsel %vm98, %v506, 0.0
    %511 = vadd.xlane.f32.xlu0 %v510
    %v512 = vpop.xlane.xlu0 %511
    %vm513 = vcmp.lt.f32.partialorder %v509, 13.0
    %vm514 = vcmp.lt.f32.partialorder %v512, 13.0
    %v515 = vsel %vm513, 1, 0
    %v516 = vsel %vm514, 1, 0
    %v517 = vcvt.s32.f32 %v515
    %v518 = vcvt.s32.f32 %v516
    %v519 = vmul.f32 %v358, %v486
    %v520 = vmul.f32 %v359, %v491
    %v521 = vmul.f32 %v519, %v517
    %v522 = vmul.f32 %v520, %v518
    %v523 = vld [vmem:[%s6] sm:$0xff]
    %v524 = vld [vmem:[%s6 + $0x8] sm:$0xff]
    %v525 = vld [vmem:[%s6 + $0x10] sm:$0xff]
    %v526 = vld [vmem:[%s6 + $0x18] sm:$0xff]
    %v527 = vld [vmem:[%s7] sm:$0xff]
    %v528 = vld [vmem:[%s7 + $0x8] sm:$0xff]
    %v529 = vld [vmem:[%s7 + $0x10] sm:$0xff]
    %v530 = vld [vmem:[%s7 + $0x18] sm:$0xff]
    %v531 = vld [vmem:[#allocation7] sm:$0x1]
    %532 = vmatprep.subr.mxu0 0.0
    %533 = vmatpush1.msra.mxu0 0.0
    %534 = vmatprep.subr.mxu0 0.0
    %535 = vmatpush1.msra.mxu0 0.0
    %536 = vmatprep.subr.mxu0 0.0
    %537 = vmatpush1.msra.mxu0 0.0
    %538 = vmatprep.subr.mxu0 0.0
    %539 = vmatpush1.msra.mxu0 0.0
    %540 = vmatprep.subr.mxu0 0.0
    %541 = vmatpush1.msra.mxu0 0.0
    %542 = vmatprep.subr.mxu0 0.0
    %543 = vmatpush1.msra.mxu0 0.0
    %544 = vmatprep.subr.mxu0 0.0
    %545 = vmatpush1.msra.mxu0 0.0
    %546 = vmatprep.subr.mxu0 0.0
    %547 = vmatpush1.msra.mxu0 0.0
    %548 = vmatprep.subr.mxu0 0.0
    %549 = vmatpush1.msra.mxu0 0.0
    %550 = vmatprep.subr.mxu0 0.0
    %551 = vmatpush1.msra.mxu0 0.0
    %552 = vmatprep.subr.mxu0 0.0
    %553 = vmatpush1.msra.mxu0 0.0
    %554 = vmatprep.subr.mxu0 0.0
    %555 = vmatpush1.msra.mxu0 0.0
    %556 = vmatprep.subr.mxu0 0.0
    %557 = vmatpush1.msra.mxu0 0.0
    %558 = vmatprep.subr.mxu0 0.0
    %559 = vmatpush1.msra.mxu0 0.0
    %560 = vmatprep.subr.mxu0 0.0
    %561 = vmatpush1.msra.mxu0 %v522
    %562 = vmatprep.subr.mxu0 0.0
    %563 = vmatpush1.msra.mxu0 %v521
    %564 = vmatprep.subr.mxu0 0.0
    %565 = vmatpush2.msra.mxu0 0.0
    %566 = vmatprep.subr.mxu0 0.0
    %567 = vmatpush2.msra.mxu0 0.0
    %568 = vmatprep.subr.mxu0 0.0
    %569 = vmatpush2.msra.mxu0 0.0
    %570 = vmatprep.subr.mxu0 0.0
    %571 = vmatpush2.msra.mxu0 0.0
    %572 = vmatprep.subr.mxu0 0.0
    %573 = vmatpush2.msra.mxu0 0.0
    %574 = vmatprep.subr.mxu0 0.0
    %575 = vmatpush2.msra.mxu0 0.0
    %576 = vmatprep.subr.mxu0 0.0
    %577 = vmatpush2.msra.mxu0 0.0
    %578 = vmatprep.subr.mxu0 0.0
    %579 = vmatpush2.msra.mxu0 0.0
    %580 = vmatprep.subr.mxu0 0.0
    %581 = vmatpush2.msra.mxu0 0.0
    %582 = vmatprep.subr.mxu0 0.0
    %583 = vmatpush2.msra.mxu0 0.0
    %584 = vmatprep.subr.mxu0 0.0
    %585 = vmatpush2.msra.mxu0 0.0
    %586 = vmatprep.subr.mxu0 0.0
    %587 = vmatpush2.msra.mxu0 0.0
    %588 = vmatprep.subr.mxu0 0.0
    %589 = vmatpush2.msra.mxu0 0.0
    %590 = vmatprep.subr.mxu0 0.0
    %591 = vmatpush2.msra.mxu0 0.0
    %592 = vmatprep.subr.mxu0 0.0
    %593 = vmatpush2.msra.mxu0 0.0
    %594 = vmatprep.subr.mxu0 0.0
    %595 = vmatpush2.msra.mxu0 0.0
    %596 = vmatprep.mubr.f32.mxu0 0.0
    %597 = vmatmul.mubr.f32.gmra.mxu0 %v100
    %v598 = vpop.f32.mrf.mxu0
    %v599 = vadd.f32 0.0, %v598
    %v600 = vpop.f32.mrf.mxu0
    %601 = vmatprep.mubr.f32.mxu0 0.0
    %602 = vmatmul.mubr.f32.gmra.mxu0 %v103
    %v603 = vpop.f32.mrf.mxu0
    %v604 = vadd.f32 0.0, %v603
    %v605 = vpop.f32.mrf.mxu0
    %606 = vdwg.mxu0
    %v608 = vsel %vm361, %v521, 0
    %v611 = vsel %vm361, %v522, 0
    %613 = vmatprep.subr.mxu0 0.0
    %614 = vmatpush1.msra.mxu0 0.0
    %615 = vmatprep.subr.mxu0 0.0
    %616 = vmatpush1.msra.mxu0 0.0
    %617 = vmatprep.subr.mxu0 0.0
    %618 = vmatpush1.msra.mxu0 0.0
    %619 = vmatprep.subr.mxu0 0.0
    %620 = vmatpush1.msra.mxu0 0.0
    %621 = vmatprep.subr.mxu0 0.0
    %622 = vmatpush1.msra.mxu0 0.0
    %623 = vmatprep.subr.mxu0 0.0
    %624 = vmatpush1.msra.mxu0 0.0
    %625 = vmatprep.subr.mxu0 0.0
    %626 = vmatpush1.msra.mxu0 0.0
    %627 = vmatprep.subr.mxu0 0.0
    %628 = vmatpush1.msra.mxu0 0.0
    %629 = vmatprep.subr.mxu0 0.0
    %630 = vmatpush1.msra.mxu0 0.0
    %631 = vmatprep.subr.mxu0 0.0
    %632 = vmatpush1.msra.mxu0 0.0
    %633 = vmatprep.subr.mxu0 0.0
    %634 = vmatpush1.msra.mxu0 0.0
    %635 = vmatprep.subr.mxu0 0.0
    %636 = vmatpush1.msra.mxu0 0.0
    %637 = vmatprep.subr.mxu0 0.0
    %638 = vmatpush1.msra.mxu0 %v530
    %639 = vmatprep.subr.mxu0 0.0
    %640 = vmatpush1.msra.mxu0 %v529
    %641 = vmatprep.subr.mxu0 0.0
    %642 = vmatpush1.msra.mxu0 %v528
    %643 = vmatprep.subr.mxu0 0.0
    %644 = vmatpush1.msra.mxu0 %v527
    %645 = vmatprep.subr.mxu0 0.0
    %646 = vmatpush2.msra.mxu0 0.0
    %647 = vmatprep.subr.mxu0 0.0
    %648 = vmatpush2.msra.mxu0 0.0
    %649 = vmatprep.subr.mxu0 0.0
    %650 = vmatpush2.msra.mxu0 0.0
    %651 = vmatprep.subr.mxu0 0.0
    %652 = vmatpush2.msra.mxu0 0.0
    %653 = vmatprep.subr.mxu0 0.0
    %654 = vmatpush2.msra.mxu0 0.0
    %655 = vmatprep.subr.mxu0 0.0
    %656 = vmatpush2.msra.mxu0 0.0
    %657 = vmatprep.subr.mxu0 0.0
    %658 = vmatpush2.msra.mxu0 0.0
    %659 = vmatprep.subr.mxu0 0.0
    %660 = vmatpush2.msra.mxu0 0.0
    %661 = vmatprep.subr.mxu0 0.0
    %662 = vmatpush2.msra.mxu0 0.0
    %663 = vmatprep.subr.mxu0 0.0
    %664 = vmatpush2.msra.mxu0 0.0
    %665 = vmatprep.subr.mxu0 0.0
    %666 = vmatpush2.msra.mxu0 0.0
    %667 = vmatprep.subr.mxu0 0.0
    %668 = vmatpush2.msra.mxu0 0.0
    %669 = vmatprep.subr.mxu0 0.0
    %670 = vmatpush2.msra.mxu0 0.0
    %671 = vmatprep.subr.mxu0 0.0
    %672 = vmatpush2.msra.mxu0 0.0
    %673 = vmatprep.subr.mxu0 0.0
    %674 = vmatpush2.msra.mxu0 0.0
    %675 = vmatprep.subr.mxu0 0.0
    %676 = vmatpush2.msra.mxu0 0.0
    %677 = vmatprep.mubr.f32.mxu0 0.0
    %678 = vmatmul.mubr.f32.gmra.mxu0 %v608
    %v679 = vpop.f32.mrf.mxu0
    %v680 = vadd.f32 0.0, %v679
    %v681 = vpop.f32.mrf.mxu0
    %682 = vmatprep.mubr.f32.mxu0 0.0
    %683 = vmatmul.mubr.f32.gmra.mxu0 %v611
    %v684 = vpop.f32.mrf.mxu0
    %v685 = vadd.f32 0.0, %v684
    %v686 = vpop.f32.mrf.mxu0
    %687 = vdwg.mxu0
    %v689 = vsel %vm361, %v599, 0
    %v692 = vsel %vm361, %v604, 0
    %694 = vmatprep.subr.mxu0 0.0
    %695 = vmatpush1.msra.mxu0 0.0
    %696 = vmatprep.subr.mxu0 0.0
    %697 = vmatpush1.msra.mxu0 0.0
    %698 = vmatprep.subr.mxu0 0.0
    %699 = vmatpush1.msra.mxu0 0.0
    %700 = vmatprep.subr.mxu0 0.0
    %701 = vmatpush1.msra.mxu0 0.0
    %702 = vmatprep.subr.mxu0 0.0
    %703 = vmatpush1.msra.mxu0 0.0
    %704 = vmatprep.subr.mxu0 0.0
    %705 = vmatpush1.msra.mxu0 0.0
    %706 = vmatprep.subr.mxu0 0.0
    %707 = vmatpush1.msra.mxu0 0.0
    %708 = vmatprep.subr.mxu0 0.0
    %709 = vmatpush1.msra.mxu0 0.0
    %710 = vmatprep.subr.mxu0 0.0
    %711 = vmatpush1.msra.mxu0 0.0
    %712 = vmatprep.subr.mxu0 0.0
    %713 = vmatpush1.msra.mxu0 0.0
    %714 = vmatprep.subr.mxu0 0.0
    %715 = vmatpush1.msra.mxu0 0.0
    %716 = vmatprep.subr.mxu0 0.0
    %717 = vmatpush1.msra.mxu0 0.0
    %718 = vmatprep.subr.mxu0 0.0
    %719 = vmatpush1.msra.mxu0 %v526
    %720 = vmatprep.subr.mxu0 0.0
    %721 = vmatpush1.msra.mxu0 %v525
    %722 = vmatprep.subr.mxu0 0.0
    %723 = vmatpush1.msra.mxu0 %v524
    %724 = vmatprep.subr.mxu0 0.0
    %725 = vmatpush1.msra.mxu0 %v523
    %726 = vmatprep.subr.mxu0 0.0
    %727 = vmatpush2.msra.mxu0 0.0
    %728 = vmatprep.subr.mxu0 0.0
    %729 = vmatpush2.msra.mxu0 0.0
    %730 = vmatprep.subr.mxu0 0.0
    %731 = vmatpush2.msra.mxu0 0.0
    %732 = vmatprep.subr.mxu0 0.0
    %733 = vmatpush2.msra.mxu0 0.0
    %734 = vmatprep.subr.mxu0 0.0
    %735 = vmatpush2.msra.mxu0 0.0
    %736 = vmatprep.subr.mxu0 0.0
    %737 = vmatpush2.msra.mxu0 0.0
    %738 = vmatprep.subr.mxu0 0.0
    %739 = vmatpush2.msra.mxu0 0.0
    %740 = vmatprep.subr.mxu0 0.0
    %741 = vmatpush2.msra.mxu0 0.0
    %742 = vmatprep.subr.mxu0 0.0
    %743 = vmatpush2.msra.mxu0 0.0
    %744 = vmatprep.subr.mxu0 0.0
    %745 = vmatpush2.msra.mxu0 0.0
    %746 = vmatprep.subr.mxu0 0.0
    %747 = vmatpush2.msra.mxu0 0.0
    %748 = vmatprep.subr.mxu0 0.0
    %749 = vmatpush2.msra.mxu0 0.0
    %750 = vmatprep.subr.mxu0 0.0
    %751 = vmatpush2.msra.mxu0 0.0
    %752 = vmatprep.subr.mxu0 0.0
    %753 = vmatpush2.msra.mxu0 0.0
    %754 = vmatprep.subr.mxu0 0.0
    %755 = vmatpush2.msra.mxu0 0.0
    %756 = vmatprep.subr.mxu0 0.0
    %757 = vmatpush2.msra.mxu0 0.0
    %758 = vmatprep.mubr.f32.mxu0 0.0
    %759 = vmatmul.mubr.f32.gmra.mxu0 %v689
    %v760 = vpop.f32.mrf.mxu0
    %v761 = vadd.f32 %v680, %v760
    %v762 = vpop.f32.mrf.mxu0
    %763 = vmatprep.mubr.f32.mxu0 0.0
    %764 = vmatmul.mubr.f32.gmra.mxu0 %v692
    %v765 = vpop.f32.mrf.mxu0
    %v766 = vadd.f32 %v685, %v765
    %v767 = vpop.f32.mrf.mxu0
    %768 = vdwg.mxu0
    %v770 = vlaneseq
    %v771 = vshrl.u32 %v770, 7
    %v772 = vsub.s32 0, %v771
    %v773 = vrot.slane %v531, %v772
    %v775 = vadd.f32 %v761, %v773
    %v776 = vadd.f32 %v766, %v773
    %v777 = vmax.f32 %v775, 0.0
    %v778 = vmax.f32 %v776, 0.0
    %v779 = vld [vmem:[%s9] sm:$0x1]
    %v781 = vsel %vm361, %v779, 0
    %v784 = vsel %vm361, %v777, 0
    %v787 = vsel %vm361, %v778, 0
    %789 = vmatprep.subr.mxu0 0.0
    %790 = vmatpush1.xpose.msra.mxu0 0.0
    %791 = vmatprep.subr.mxu0 0.0
    %792 = vmatpush1.xpose.msra.mxu0 0.0
    %793 = vmatprep.subr.mxu0 0.0
    %794 = vmatpush1.xpose.msra.mxu0 0.0
    %795 = vmatprep.subr.mxu0 0.0
    %796 = vmatpush1.xpose.msra.mxu0 0.0
    %797 = vmatprep.subr.mxu0 0.0
    %798 = vmatpush1.xpose.msra.mxu0 0.0
    %799 = vmatprep.subr.mxu0 0.0
    %800 = vmatpush1.xpose.msra.mxu0 0.0
    %801 = vmatprep.subr.mxu0 0.0
    %802 = vmatpush1.xpose.msra.mxu0 0.0
    %803 = vmatprep.subr.mxu0 0.0
    %804 = vmatpush1.xpose.msra.mxu0 0.0
    %805 = vmatprep.subr.mxu0 0.0
    %806 = vmatpush1.xpose.msra.mxu0 0.0
    %807 = vmatprep.subr.mxu0 0.0
    %808 = vmatpush1.xpose.msra.mxu0 0.0
    %809 = vmatprep.subr.mxu0 0.0
    %810 = vmatpush1.xpose.msra.mxu0 0.0
    %811 = vmatprep.subr.mxu0 0.0
    %812 = vmatpush1.xpose.msra.mxu0 0.0
    %813 = vmatprep.subr.mxu0 0.0
    %814 = vmatpush1.xpose.msra.mxu0 0.0
    %815 = vmatprep.subr.mxu0 0.0
    %816 = vmatpush1.xpose.msra.mxu0 0.0
    %817 = vmatprep.subr.mxu0 0.0
    %818 = vmatpush1.xpose.msra.mxu0 %v787
    %819 = vmatprep.subr.mxu0 0.0
    %820 = vmatpush1.xpose.msra.mxu0 %v784
    %821 = vmatprep.subr.mxu0 0.0
    %822 = vmatpush2.xpose.msra.mxu0 0.0
    %823 = vmatprep.subr.mxu0 0.0
    %824 = vmatpush2.xpose.msra.mxu0 0.0
    %825 = vmatprep.subr.mxu0 0.0
    %826 = vmatpush2.xpose.msra.mxu0 0.0
    %827 = vmatprep.subr.mxu0 0.0
    %828 = vmatpush2.xpose.msra.mxu0 0.0
    %829 = vmatprep.subr.mxu0 0.0
    %830 = vmatpush2.xpose.msra.mxu0 0.0
    %831 = vmatprep.subr.mxu0 0.0
    %832 = vmatpush2.xpose.msra.mxu0 0.0
    %833 = vmatprep.subr.mxu0 0.0
    %834 = vmatpush2.xpose.msra.mxu0 0.0
    %835 = vmatprep.subr.mxu0 0.0
    %836 = vmatpush2.xpose.msra.mxu0 0.0
    %837 = vmatprep.subr.mxu0 0.0
    %838 = vmatpush2.xpose.msra.mxu0 0.0
    %839 = vmatprep.subr.mxu0 0.0
    %840 = vmatpush2.xpose.msra.mxu0 0.0
    %841 = vmatprep.subr.mxu0 0.0
    %842 = vmatpush2.xpose.msra.mxu0 0.0
    %843 = vmatprep.subr.mxu0 0.0
    %844 = vmatpush2.xpose.msra.mxu0 0.0
    %845 = vmatprep.subr.mxu0 0.0
    %846 = vmatpush2.xpose.msra.mxu0 0.0
    %847 = vmatprep.subr.mxu0 0.0
    %848 = vmatpush2.xpose.msra.mxu0 0.0
    %849 = vmatprep.subr.mxu0 0.0
    %850 = vmatpush2.xpose.msra.mxu0 0.0
    %851 = vmatprep.subr.mxu0 0.0
    %852 = vmatpush2.xpose.msra.mxu0 0.0
    %853 = vmatprep.mubr.f32.mxu0 0.0
    %854 = vmatmul.mubr.f32.gmra.mxu0 %v781
    %v855 = vpop.f32.mrf.mxu0
    %v856 = vadd.f32 0.0, %v855
    %v857 = vpop.f32.mrf.mxu0
    %858 = vdwg.mxu0
    %v859 = vtanh.pop %v856
    %860 = vxpose.xlu0.b32.start [1/16] %v859, 128
    %861 = vxpose.xlu0.b32.cont [2/16] 0.0, 128
    %862 = vxpose.xlu0.b32.cont [3/16] 0.0, 128
    %863 = vxpose.xlu0.b32.cont [4/16] 0.0, 128
    %864 = vxpose.xlu0.b32.cont [5/16] 0.0, 128
    %865 = vxpose.xlu0.b32.cont [6/16] 0.0, 128
    %866 = vxpose.xlu0.b32.cont [7/16] 0.0, 128
    %867 = vxpose.xlu0.b32.cont [8/16] 0.0, 128
    %868 = vxpose.xlu0.b32.cont [9/16] 0.0, 128
    %869 = vxpose.xlu0.b32.cont [10/16] 0.0, 128
    %870 = vxpose.xlu0.b32.cont [11/16] 0.0, 128
    %871 = vxpose.xlu0.b32.cont [12/16] 0.0, 128
    %872 = vxpose.xlu0.b32.cont [13/16] 0.0, 128
    %873 = vxpose.xlu0.b32.cont [14/16] 0.0, 128
    %874 = vxpose.xlu0.b32.cont [15/16] 0.0, 128
    %875 = vxpose.xlu0.b32.end [16/16] 0.0, 128
    %v876 = vpop.trf.xlu0
    %v877 = vpop.trf.xlu0
    %v878 = vpop.trf.xlu0
    %v879 = vpop.trf.xlu0
    %v880 = vpop.trf.xlu0
    %v881 = vpop.trf.xlu0
    %v882 = vpop.trf.xlu0
    %v883 = vpop.trf.xlu0
    %v884 = vpop.trf.xlu0
    %v885 = vpop.trf.xlu0
    %v886 = vpop.trf.xlu0
    %v887 = vpop.trf.xlu0
    %v888 = vpop.trf.xlu0
    %v889 = vpop.trf.xlu0
    %v890 = vpop.trf.xlu0
    %v891 = vpop.trf.xlu0
    %vm892 = vcmp.gt.f32.partialorder %v517, 0.0
    %vm893 = vcmp.gt.f32.partialorder %v518, 0.0
    %v894 = vsel %vm892, %v876, -2.0
    %v895 = vsel %vm893, %v877, -2.0
    %896 = vxpose.xlu0.b32.start [1/16] %v894, 128
    %897 = vxpose.xlu0.b32.cont [2/16] %v895, 128
    %898 = vxpose.xlu0.b32.cont [3/16] 0.0, 128
    %899 = vxpose.xlu0.b32.cont [4/16] 0.0, 128
    %900 = vxpose.xlu0.b32.cont [5/16] 0.0, 128
    %901 = vxpose.xlu0.b32.cont [6/16] 0.0, 128
    %902 = vxpose.xlu0.b32.cont [7/16] 0.0, 128
    %903 = vxpose.xlu0.b32.cont [8/16] 0.0, 128
    %904 = vxpose.xlu0.b32.cont [9/16] 0.0, 128
    %905 = vxpose.xlu0.b32.cont [10/16] 0.0, 128
    %906 = vxpose.xlu0.b32.cont [11/16] 0.0, 128
    %907 = vxpose.xlu0.b32.cont [12/16] 0.0, 128
    %908 = vxpose.xlu0.b32.cont [13/16] 0.0, 128
    %909 = vxpose.xlu0.b32.cont [14/16] 0.0, 128
    %910 = vxpose.xlu0.b32.cont [15/16] 0.0, 128
    %911 = vxpose.xlu0.b32.end [16/16] 0.0, 128
    %v912 = vpop.trf.xlu0
    %v913 = vpop.trf.xlu0
    %v914 = vpop.trf.xlu0
    %v915 = vpop.trf.xlu0
    %v916 = vpop.trf.xlu0
    %v917 = vpop.trf.xlu0
    %v918 = vpop.trf.xlu0
    %v919 = vpop.trf.xlu0
    %v920 = vpop.trf.xlu0
    %v921 = vpop.trf.xlu0
    %v922 = vpop.trf.xlu0
    %v923 = vpop.trf.xlu0
    %v924 = vpop.trf.xlu0
    %v925 = vpop.trf.xlu0
    %v926 = vpop.trf.xlu0
    %v927 = vpop.trf.xlu0
    %v928 = vlaneseq
    %v929 = vshrl.u32 %v928, 7
    %v930 = vsub.s32 0, %v929
    %v931 = vrot.slane %v912, %v930
    %933 = vset.pattern.permute.xlu0 0
    %934 = vperm.xlu0 %933, %v894
    %v935 = vpop.permute.xlu0 %934
    %938 = vset.pattern.permute.xlu0 0
    %939 = vperm.xlu0 %938, %v895
    %v940 = vpop.permute.xlu0 %939
    %vm942 = vcmp.gt.f32.partialorder %v931, %v935
    %vm943 = vcmp.gt.f32.partialorder %v931, %v940
    %vm944 = vcmp.eq.f32.partialorder %v931, %v935
    %vm945 = vcmp.eq.f32.partialorder %v931, %v940
    %vm946 = vmand %vm944, %vm497
    %vm947 = vmand %vm945, %vm498
    %vm948 = vmor %vm942, %vm946
    %vm949 = vmor %vm943, %vm947
    %v950 = vsel %vm948, 1, 0
    %v951 = vsel %vm949, 1, 0
    %v952 = vcvt.s32.f32 %v950
    %v953 = vcvt.s32.f32 %v951
    %v954 = vsel %vm98, %v952, 0.0
    %955 = vadd.xlane.f32.xlu0 %v954
    %v956 = vpop.xlane.xlu0 %955
    %v957 = vsel %vm98, %v953, 0.0
    %958 = vadd.xlane.f32.xlu0 %v957
    %v959 = vpop.xlane.xlu0 %958
    %vm960 = vcmp.lt.f32.partialorder %v956, 11.0
    %vm961 = vcmp.lt.f32.partialorder %v959, 11.0
    %v962 = vsel %vm960, 1, 0
    %v963 = vsel %vm961, 1, 0
    %v964 = vcvt.s32.f32 %v962
    %v965 = vcvt.s32.f32 %v963
    %v966 = vmul.f32 %v964, %v517
    %v967 = vmul.f32 %v965, %v518
    %969 = vset.pattern.permute.xlu0 0
    %970 = vperm.xlu0 %969, %v876
    %v971 = vpop.permute.xlu0 %970
    %974 = vset.pattern.permute.xlu0 0
    %975 = vperm.xlu0 %974, %v877
    %v976 = vpop.permute.xlu0 %975
    %v978 = vmul.f32 %v777, %v971
    %v979 = vmul.f32 %v778, %v976
    %v980 = vmul.f32 %v978, %v966
    %v981 = vmul.f32 %v979, %v967
    %v982 = vsel %vm361, %v980, 0.0
    %v983 = vsel %vm361, %v981, 0.0
    %v984 = vadd.f32 %v982, %v983
    %v985 = vrot.slane %v984, 4
    %v986 = vadd.f32 %v984, %v985
    %v987 = vrot.slane %v986, 2
    %v988 = vadd.f32 %v986, %v987
    %v989 = vrot.slane %v988, 1
    %v990 = vadd.f32 %v988, %v989
    %v991 = vmul.f32 %v990, 0.09090909
    %v992 = vld [vmem:[%s10] sm:$0xff]
    %v993 = vld [vmem:[%s10 + $0x8] sm:$0xff]
    %v994 = vld [vmem:[%s10 + $0x10] sm:$0xff]
    %v995 = vld [vmem:[%s10 + $0x18] sm:$0xff]
    %v996 = vld [vmem:[#allocation8] sm:$0x1]
    %v998 = vsel %vm361, %v991, 0
    %1000 = vmatprep.subr.mxu0 0.0
    %1001 = vmatpush1.msra.mxu0 0.0
    %1002 = vmatprep.subr.mxu0 0.0
    %1003 = vmatpush1.msra.mxu0 0.0
    %1004 = vmatprep.subr.mxu0 0.0
    %1005 = vmatpush1.msra.mxu0 0.0
    %1006 = vmatprep.subr.mxu0 0.0
    %1007 = vmatpush1.msra.mxu0 0.0
    %1008 = vmatprep.subr.mxu0 0.0
    %1009 = vmatpush1.msra.mxu0 0.0
    %1010 = vmatprep.subr.mxu0 0.0
    %1011 = vmatpush1.msra.mxu0 0.0
    %1012 = vmatprep.subr.mxu0 0.0
    %1013 = vmatpush1.msra.mxu0 0.0
    %1014 = vmatprep.subr.mxu0 0.0
    %1015 = vmatpush1.msra.mxu0 0.0
    %1016 = vmatprep.subr.mxu0 0.0
    %1017 = vmatpush1.msra.mxu0 0.0
    %1018 = vmatprep.subr.mxu0 0.0
    %1019 = vmatpush1.msra.mxu0 0.0
    %1020 = vmatprep.subr.mxu0 0.0
    %1021 = vmatpush1.msra.mxu0 0.0
    %1022 = vmatprep.subr.mxu0 0.0
    %1023 = vmatpush1.msra.mxu0 0.0
    %1024 = vmatprep.subr.mxu0 0.0
    %1025 = vmatpush1.msra.mxu0 %v995
    %1026 = vmatprep.subr.mxu0 0.0
    %1027 = vmatpush1.msra.mxu0 %v994
    %1028 = vmatprep.subr.mxu0 0.0
    %1029 = vmatpush1.msra.mxu0 %v993
    %1030 = vmatprep.subr.mxu0 0.0
    %1031 = vmatpush1.msra.mxu0 %v992
    %1032 = vmatprep.subr.mxu0 0.0
    %1033 = vmatpush2.msra.mxu0 0.0
    %1034 = vmatprep.subr.mxu0 0.0
    %1035 = vmatpush2.msra.mxu0 0.0
    %1036 = vmatprep.subr.mxu0 0.0
    %1037 = vmatpush2.msra.mxu0 0.0
    %1038 = vmatprep.subr.mxu0 0.0
    %1039 = vmatpush2.msra.mxu0 0.0
    %1040 = vmatprep.subr.mxu0 0.0
    %1041 = vmatpush2.msra.mxu0 0.0
    %1042 = vmatprep.subr.mxu0 0.0
    %1043 = vmatpush2.msra.mxu0 0.0
    %1044 = vmatprep.subr.mxu0 0.0
    %1045 = vmatpush2.msra.mxu0 0.0
    %1046 = vmatprep.subr.mxu0 0.0
    %1047 = vmatpush2.msra.mxu0 0.0
    %1048 = vmatprep.subr.mxu0 0.0
    %1049 = vmatpush2.msra.mxu0 0.0
    %1050 = vmatprep.subr.mxu0 0.0
    %1051 = vmatpush2.msra.mxu0 0.0
    %1052 = vmatprep.subr.mxu0 0.0
    %1053 = vmatpush2.msra.mxu0 0.0
    %1054 = vmatprep.subr.mxu0 0.0
    %1055 = vmatpush2.msra.mxu0 0.0
    %1056 = vmatprep.subr.mxu0 0.0
    %1057 = vmatpush2.msra.mxu0 0.0
    %1058 = vmatprep.subr.mxu0 0.0
    %1059 = vmatpush2.msra.mxu0 0.0
    %1060 = vmatprep.subr.mxu0 0.0
    %1061 = vmatpush2.msra.mxu0 0.0
    %1062 = vmatprep.subr.mxu0 0.0
    %1063 = vmatpush2.msra.mxu0 0.0
    %1064 = vmatprep.mubr.f32.mxu0 0.0
    %1065 = vmatmul.mubr.f32.gmra.mxu0 %v998
    %v1066 = vpop.f32.mrf.mxu0
    %v1067 = vadd.f32 %v996, %v1066
    %v1068 = vpop.f32.mrf.mxu0
    %1069 = vdwg.mxu0
    %vm1070 = vcmask 57344
    %1071 = vst.msk [vmem:[#allocation10] sm:$0x1] %vm1070, %v1067
    // Predicated region
    $region66: #{hierarchical_gcn_forward.1} parent=1 // pred_check
      _
    $region67: #{hierarchical_gcn_forward.1} parent=1 // pred_check_branch
      %1073 = sbr.rel (0) target = $region69
    $region68: #{hierarchical_gcn_forward.1} parent=1 // pred_region
      %s1075 = ssub.s32 16, 16
      %1076 = vsyncadd [#allocation4], %s1075
      %s1078 = sshll.u32 [#allocation10], 4
      %s1079 = int_to_ptr.vmem [resolvable:$true] %s1078
      %1081 = dma.vmem_to_hbm [thread:$0]  %s1079, 16, %s12, [#allocation4]
    $region69: #{hierarchical_gcn_forward.1} parent=1 // pred_fallthru
      _
    // Predicated region
    $region70: #{hierarchical_gcn_forward.1} parent=1 // pred_check
      _
    $region71: #{hierarchical_gcn_forward.1} parent=1 // pred_check_branch
      %1083 = sbr.rel (0) target = $region73
    $region72: #{hierarchical_gcn_forward.1} parent=1 // pred_region
      %1084 = dma.done [#allocation4], 16
    $region73: #{hierarchical_gcn_forward.1} parent=1 // pred_fallthru
      _
    %1085 = vsyncpa [#allocation3], 1
    %1086 = vsyncpa [#allocation6], 1
    %1087 = vsyncpa [#allocation9], 1
    %1088 = vsyncpa [#allocation4], 1

</llo_original>
